<compile_context>
chip_gen: v7x
topology: tpu7x:2x2x1
jax: 0.10.0
libtpu: 0.0.40
codegen_flags: <defaults>
</compile_context>

<pallas_src>
import functools
import math

import jax
import jax.numpy as jnp
from jax.experimental import pallas as pl
from jax.experimental.pallas import tpu as pltpu


def _round_up(x, m):
    return ((x + m - 1) // m) * m


# Conservative budget: double-buffered tiles must fit even v5e's 16 MiB default
# scoped VMEM with headroom.
_VMEM_BUDGET_BYTES = 12 * 1024 * 1024


def _linear_kernel(x_ref, w_ref, b_ref, o_ref, *, std_init):
    # x_ref: (tm, in_dim)   VMEM
    # w_ref: (tn, in_dim)   VMEM  (PyTorch layout; contracted on its last dim)
    # b_ref: (1, tn)        VMEM  (already std_init*bias + bias_init)
    # o_ref: (tm, tn)       VMEM
    acc = jax.lax.dot_general(
        x_ref[...],
        w_ref[...],
        dimension_numbers=(((1,), (1,)), ((), ())),   # x @ w.T on the MXU
        preferred_element_type=jnp.float32,
    )
    if std_init != 1.0:                                # static (trace-time) check
        acc = acc * jnp.float32(std_init)
    o_ref[...] = (acc + b_ref[...]).astype(o_ref.dtype)


def linear_layer(x, weight, bias, *, std_init=1.0, bias_init=0.0, tm=512, tn=256):
    """x: [B, in_dim], weight: [out_dim, in_dim] (PyTorch layout), bias: [out_dim]."""
    B, in_dim = x.shape
    out_dim, in_dim_w = weight.shape
    assert in_dim_w == in_dim, "weight must be [out_dim, in_dim]"
    itemsize = jnp.dtype(x.dtype).itemsize

    # Fold std_init and bias_init into an effective bias (tiny, out_dim elems):
    #   std*(x@W.T + b) + b0 == std*(x@W.T) + (std*b + b0)
    b_eff = (jnp.float32(std_init) * bias.astype(jnp.float32)
             + jnp.float32(bias_init)).reshape(1, out_dim)

    # ---- tile sizing -------------------------------------------------------
    # N tile: full out_dim when small (block == full dim is always legal),
    # otherwise 256 (MXU-aligned, lane-dense, multiple of 128).
    tn_eff = out_dim if out_dim <= tn else tn

    # M tile: as large as requested, but (a) <= B, (b) >= 2 row blocks when B
    # allows (v7x has 2 TensorCores), (c) fits the conservative VMEM budget.
    tm_eff = min(tm, B)
    if tm_eff == B and B >= 16:
        tm_eff = max(8, _round_up(pl.cdiv(B, 2), 8))

    def vmem_bytes(tm_, tn_):
        # double-buffered x tile + weight tile + bias tile + out tile
        return 2 * itemsize * (tm_ * in_dim + tn_ * in_dim + tn_ + tm_ * tn_)

    while tm_eff > 8 and vmem_bytes(tm_eff, tn_eff) > _VMEM_BUDGET_BYTES:
        tm_eff = max(8, _round_up(tm_eff // 2, 8))

    grid = (pl.cdiv(B, tm_eff), pl.cdiv(out_dim, tn_eff))

    kernel = functools.partial(_linear_kernel, std_init=float(std_init))

    return pl.pallas_call(
        kernel,
        out_shape=jax.ShapeDtypeStruct((B, out_dim), x.dtype),
        grid_spec=pltpu.PrefetchScalarGridSpec(
            num_scalar_prefetch=0,
            grid=grid,
            in_specs=[
                pl.BlockSpec((tm_eff, in_dim), lambda i, j: (i, 0)),   # x rows
                pl.BlockSpec((tn_eff, in_dim), lambda i, j: (j, 0)),   # weight rows
                pl.BlockSpec((1, tn_eff), lambda i, j: (0, j)),        # eff. bias
            ],
            out_specs=pl.BlockSpec((tm_eff, tn_eff), lambda i, j: (i, j)),
        ),
        compiler_params=pltpu.CompilerParams(
            dimension_semantics=("parallel", "parallel"),
        ),
    )(x, weight, b_eff)


def init_params(key, in_dim, out_dim, *, is_first=False, freq_init=False):
    """Deterministic synthetic init matching the PyTorch module's shapes/dists."""
    kw, kb = jax.random.split(key)
    if is_first:
        w = jax.random.uniform(
            kw, (out_dim, in_dim), minval=-1.0 / in_dim, maxval=1.0 / in_dim,
            dtype=jnp.float32)
    elif freq_init:
        lim = math.sqrt(6.0 / in_dim) / 25.0
        w = jax.random.uniform(
            kw, (out_dim, in_dim), minval=-lim, maxval=lim, dtype=jnp.float32)
    else:
        # kaiming_normal_(a=0.2, mode='fan_in', nonlinearity='leaky_relu'), scaled by 0.25
        gain = math.sqrt(2.0 / (1.0 + 0.2 ** 2))
        std = gain / math.sqrt(in_dim)
        w = 0.25 * std * jax.random.normal(kw, (out_dim, in_dim), dtype=jnp.float32)
    blim = math.sqrt(1.0 / in_dim)
    b = jax.random.uniform(kb, (out_dim,), minval=-blim, maxval=blim,
                           dtype=jnp.float32)
    return w, b


if __name__ == "__main__":
    key = jax.random.PRNGKey(0)
    k_in1, k_p1, k_in2, k_p2 = jax.random.split(key, 4)

    # Case 1: lane-dense out_dim, two 192-row blocks (both v7x cores busy).
    B, in_dim, out_dim = 384, 128, 256
    std_init, bias_init = 1.0, 0.0
    x = jax.random.normal(k_in1, (B, in_dim), dtype=jnp.float32)
    weight, bias = init_params(k_p1, in_dim, out_dim)
    out = jax.block_until_ready(
        linear_layer(x, weight, bias, std_init=std_init, bias_init=bias_init))
    ref = std_init * (jnp.dot(x, weight.T, precision=jax.lax.Precision.HIGHEST)
                      + bias) + bias_init
    assert out.shape == (B, out_dim)
    assert jnp.allclose(out, ref, atol=1e-4, rtol=1e-4), \
        float(jnp.max(jnp.abs(out - ref)))

    # Case 2: ragged M (300) and ragged N (320 -> 256 + 64 tail), nontrivial
    # std_init / bias_init — exercises masked edge blocks and the folded bias.
    B2, in_dim2, out_dim2 = 300, 64, 320
    std2, bias02 = 2.0, 0.5
    x2 = jax.random.normal(k_in2, (B2, in_dim2), dtype=jnp.float32)
    w2, b2 = init_params(k_p2, in_dim2, out_dim2, freq_init=True)
    out2 = jax.block_until_ready(
        linear_layer(x2, w2, b2, std_init=std2, bias_init=bias02))
    ref2 = std2 * (jnp.dot(x2, w2.T, precision=jax.lax.Precision.HIGHEST)
                   + b2) + bias02
    assert out2.shape == (B2, out_dim2)
    assert jnp.allclose(out2, ref2, atol=1e-4, rtol=1e-4), \
        float(jnp.max(jnp.abs(out2 - ref2)))

    print("KERNEL_OK")
</pallas_src>

<mosaic_0001>
module attributes {stable_mosaic.version = 11 : i64} {
  func.func @_linear_kernel(%arg0: i32, %arg1: i32, %arg2: memref<192x128xf32, #tpu.memory_space<vmem>>, %arg3: memref<256x128xf32, #tpu.memory_space<vmem>>, %arg4: memref<1x256xf32, #tpu.memory_space<vmem>>, %arg5: memref<192x256xf32, #tpu.memory_space<vmem>>) attributes {dimension_semantics = [#tpu.dimension_semantics<parallel>, #tpu.dimension_semantics<parallel>], iteration_bounds = array<i64: 2, 1>, scalar_prefetch = 0 : i64, scratch_operands = 0 : i64, tpu.core_type = #tpu.core_type<tc>, window_params = [{transform_indices = @transform_0, window_bounds = array<i64: 192, 128>}, {transform_indices = @transform_1, window_bounds = array<i64: 256, 128>}, {transform_indices = @transform_2, window_bounds = array<i64: 1, 256>}, {transform_indices = @transform_3, window_bounds = array<i64: 192, 256>}]} {
    %c0 = arith.constant 0 : index
    %c0_0 = arith.constant 0 : index
    %0 = vector.load %arg2[%c0, %c0_0] : memref<192x128xf32, #tpu.memory_space<vmem>>, vector<192x128xf32>
    %c0_1 = arith.constant 0 : index
    %c0_2 = arith.constant 0 : index
    %1 = vector.load %arg3[%c0_1, %c0_2] : memref<256x128xf32, #tpu.memory_space<vmem>>, vector<256x128xf32>
    %cst = arith.constant dense<0.000000e+00> : vector<192x256xf32>
    %2 = tpu.matmul %0, %1, %cst {dimension_numbers = #tpu.dot_dimension_numbers<[1], [1], [0], [0], [0, 0, 1, 0], [], []>} : vector<192x128xf32>, vector<256x128xf32>, vector<192x256xf32> -> vector<192x256xf32>
    %c0_3 = arith.constant 0 : index
    %c0_4 = arith.constant 0 : index
    %3 = vector.load %arg4[%c0_3, %c0_4] : memref<1x256xf32, #tpu.memory_space<vmem>>, vector<1x256xf32>
    %4 = vector.broadcast %3 : vector<1x256xf32> to vector<192x256xf32>
    %5 = arith.addf %2, %4 : vector<192x256xf32>
    %c0_5 = arith.constant 0 : index
    %c0_6 = arith.constant 0 : index
    %6 = vector.load %arg5[%c0_5, %c0_6] : memref<192x256xf32, #tpu.memory_space<vmem>>, vector<192x256xf32>
    tpu.vector_store %arg5[%c0_5, %c0_6], %5 {strides = array<i32>} : memref<192x256xf32, #tpu.memory_space<vmem>>, vector<192x256xf32>,
    return
  }
  func.func @transform_0(%arg0: i32, %arg1: i32) -> (i32, i32) {
    %c0_i32 = arith.constant 0 : i32
    %c0_i32_0 = arith.constant 0 : i32
    return %arg0, %c0_i32 : i32, i32
  }
  func.func @transform_1(%arg0: i32, %arg1: i32) -> (i32, i32) {
    %c0_i32 = arith.constant 0 : i32
    %c0_i32_0 = arith.constant 0 : i32
    return %arg1, %c0_i32 : i32, i32
  }
  func.func @transform_2(%arg0: i32, %arg1: i32) -> (i32, i32) {
    %c0_i32 = arith.constant 0 : i32
    %c0_i32_0 = arith.constant 0 : i32
    return %c0_i32, %arg1 : i32, i32
  }
  func.func @transform_3(%arg0: i32, %arg1: i32) -> (i32, i32) {
    %c0_i32 = arith.constant 0 : i32
    return %arg0, %arg1 : i32, i32
  }
}

</mosaic_0001>

<llo_original>
// kernel: tpu_custom_call.1
$region0: #{tpu_custom_call.1}
  #allocation0 [shape = 'u32[]', space=smem, size = 0x4, offset = 0x4, fixed_abs, tag = 'smem constant byte address 0x4 - core index']
  #allocation1 [shape = 'u32[144,128]{1,0:T(1,128)}', space=vmem, size = 0x12000, scoped, tag = 'internal scratch']
  %s0 = inlined_call_operand.hbm [shape: f32[384,128], index: 0, kind: input, shape index: {}]
  %s1 = inlined_call_operand.hbm [shape: f32[256,128], index: 1, kind: input, shape index: {}]
  %s2 = inlined_call_operand.vmem [shape: f32[1,256], index: 2, kind: input, shape index: {}]
  %s3 = inlined_call_operand.hbm [shape: f32[384,256], index: 3, kind: output, shape index: {}]
  %s4 = sld [smem:[#allocation0]]
  $region53: #{tpu_custom_call.1} parent=0
    _
  %s6 = ssub.s32 1, %s4
  %s7 = scalar_select 0, %s6, %s4
  $region1: #{tpu_custom_call.1} parent=0
    #allocation2 [shape = 'u8[196608]{0}', space=vmem, size = 0x30000, scoped, tag = 'input window, operand 0']
    #allocation3 [shape = 's32[2]{0}', space=sflag, size = 0x8, scoped, tag = 'scoped memory for tpu_custom_call.1']
    #allocation4 [shape = 's32[2]{0}', space=sflag, size = 0x8, scoped, tag = 'scoped memory for tpu_custom_call.1']
    #allocation5 [shape = 'u8[131072]{0}', space=vmem, size = 0x20000, scoped, tag = 'input window, operand 1, single buffered']
    #allocation6 [shape = 's32[1]{0}', space=sflag, size = 0x4, scoped, tag = 'scoped memory for tpu_custom_call.1']
    #allocation7 [shape = 'u8[393216]{0}', space=vmem, size = 0x60000, scoped, tag = 'output window, operand 0']
    %8 = vsyncpa [#allocation3], 0
    %s9 = scalar_lea.sflag [#allocation3], 1
    %10 = vsyncpa %s9, 0
    %11 = vsyncpa [#allocation6], 0
    %12 = vsyncpa [#allocation4], 0
    %s13 = scalar_lea.sflag [#allocation4], 1
    %14 = vsyncpa %s13, 0
    loop: start=0, step=1, limit=4
    $region2: #{tpu_custom_call.1} parent=1 // loop_pre_header
      _
    $region3: #{tpu_custom_call.1} parent=1 // loop_header
      %s16 = sphi 0, %s20
      %p17 = scmp.ge.s32.totalorder %s16, 4
      %s23 = sphi 0, %s35
      %s24 = sphi 0, %s31
      %s25 = sphi 0, %s23
      %s26 = sphi 0, %s24
      %s27 = sphi 0, %s25
      %s28 = sphi 0, %s26
      %s38 = sphi 0, %s40
      %s41 = sphi 0, %s38
      %s42 = sphi 0, %s41
      %s58 = sphi 0, %s42
      %s64 = sphi 0, %s66
      %s67 = sphi 0, %s64
      %s68 = sphi 0, %s67
      %s84 = sphi 0, %s68
      %s90 = sphi 0, %s92
      %s93 = sphi 0, %s90
      %s94 = sphi 0, %s93
      %s110 = sphi 0, %s94
      %s118 = sphi 0, %s120
      %s121 = sphi 0, %s118
      %s122 = sphi 0, %s121
      %s138 = sphi 0, %s122
    $region4: #{tpu_custom_call.1} parent=1 // loop_header_branch
      %19 = sbr.rel (%p17) target = $region8
    $region5: #{tpu_custom_call.1} parent=1 // loop_body
      %s21 = ssub.s32 %s16, 1
      %s22 = ssub.s32 %s16, 2
      %s29 = sadd.s32 1, %s24
      %p30 = scmp.ge.s32.totalorder %s29, 1
      %s31 = scalar_select %p30, 0, %s29
      %s32 = sadd.s32 1, %s23
      %s33 = scalar_select %p30, %s32, %s23
      %p34 = scmp.ge.s32.totalorder %s33, 2
      %s35 = scalar_select %p34, 0, %s33
      %s36 = ssub.s32 %s23, %s35
      %p37 = scmp.eq.s32.totalorder %s36, 0
      %s39 = sadd.s32 %s38, 1
      %s40 = scalar_select %p37, %s38, %s39
      %p43 = pneg %p37
      %p44 = scmp.eq.s32.totalorder %s16, 1
      %p45 = por %p43, %p44
      %p46 = scmp.ne.s32.totalorder %s38, %s41
      %p47 = scmp.eq.s32.totalorder %s16, 0
      %p48 = por %p46, %p47
      %p49 = scmp.ne.s32.totalorder %s38, %s41
      %p50 = scmp.eq.s32.totalorder %s21, 1
      %p51 = por %p49, %p50
      %p52 = scmp.ne.s32.totalorder %s41, %s42
      %p53 = scmp.eq.s32.totalorder %s21, 0
      %p54 = por %p52, %p53
      %p55 = scmp.ne.s32.totalorder %s41, %s42
      %p56 = scmp.eq.s32.totalorder %s22, 1
      %p57 = por %p55, %p56
      %p59 = scmp.ne.s32.totalorder %s42, %s58
      %p60 = scmp.eq.s32.totalorder %s22, 0
      %p61 = por %p59, %p60
      %s62 = ssub.s32 %s24, %s31
      %p63 = scmp.eq.s32.totalorder %s62, 0
      %s65 = sadd.s32 %s64, 1
      %s66 = scalar_select %p63, %s64, %s65
      %p69 = pneg %p63
      %p70 = scmp.eq.s32.totalorder %s16, 1
      %p71 = por %p69, %p70
      %p72 = scmp.ne.s32.totalorder %s64, %s67
      %p73 = scmp.eq.s32.totalorder %s16, 0
      %p74 = por %p72, %p73
      %p75 = scmp.ne.s32.totalorder %s64, %s67
      %p76 = scmp.eq.s32.totalorder %s21, 1
      %p77 = por %p75, %p76
      %p78 = scmp.ne.s32.totalorder %s67, %s68
      %p79 = scmp.eq.s32.totalorder %s21, 0
      %p80 = por %p78, %p79
      %p81 = scmp.ne.s32.totalorder %s67, %s68
      %p82 = scmp.eq.s32.totalorder %s22, 1
      %p83 = por %p81, %p82
      %p85 = scmp.ne.s32.totalorder %s68, %s84
      %p86 = scmp.eq.s32.totalorder %s22, 0
      %p87 = por %p85, %p86
      %s88 = ssub.s32 %s24, %s31
      %p89 = scmp.eq.s32.totalorder %s88, 0
      %s91 = sadd.s32 %s90, 1
      %s92 = scalar_select %p89, %s90, %s91
      %p95 = pneg %p89
      %p96 = scmp.eq.s32.totalorder %s16, 1
      %p97 = por %p95, %p96
      %p98 = scmp.ne.s32.totalorder %s90, %s93
      %p99 = scmp.eq.s32.totalorder %s16, 0
      %p100 = por %p98, %p99
      %p101 = scmp.ne.s32.totalorder %s90, %s93
      %p102 = scmp.eq.s32.totalorder %s21, 1
      %p103 = por %p101, %p102
      %p104 = scmp.ne.s32.totalorder %s93, %s94
      %p105 = scmp.eq.s32.totalorder %s21, 0
      %p106 = por %p104, %p105
      %p107 = scmp.ne.s32.totalorder %s93, %s94
      %p108 = scmp.eq.s32.totalorder %s22, 1
      %p109 = por %p107, %p108
      %p111 = scmp.ne.s32.totalorder %s94, %s110
      %p112 = scmp.eq.s32.totalorder %s22, 0
      %p113 = por %p111, %p112
      %s114 = ssub.s32 %s23, %s35
      %s115 = ssub.s32 %s24, %s31
      %s116 = sor.u32 %s114, %s115
      %p117 = scmp.eq.s32.totalorder %s116, 0
      %s119 = sadd.s32 %s118, 1
      %s120 = scalar_select %p117, %s118, %s119
      %p123 = pneg %p117
      %p124 = scmp.eq.s32.totalorder %s16, 1
      %p125 = por %p123, %p124
      %p126 = scmp.ne.s32.totalorder %s118, %s121
      %p127 = scmp.eq.s32.totalorder %s16, 0
      %p128 = por %p126, %p127
      %p129 = scmp.ne.s32.totalorder %s118, %s121
      %p130 = scmp.eq.s32.totalorder %s21, 1
      %p131 = por %p129, %p130
      %p132 = scmp.ne.s32.totalorder %s121, %s122
      %p133 = scmp.eq.s32.totalorder %s21, 0
      %p134 = por %p132, %p133
      %p135 = scmp.ne.s32.totalorder %s121, %s122
      %p136 = scmp.eq.s32.totalorder %s22, 1
      %p137 = por %p135, %p136
      %p139 = scmp.ne.s32.totalorder %s122, %s138
      %p140 = scmp.eq.s32.totalorder %s22, 0
      %p141 = por %p139, %p140
      %p142 = scmp.le.s32.totalorder 1, %s16
      %p143 = scmp.lt.s32.totalorder %s16, 3
      %p144 = pnand %p142, %p143
      %p145 = pneg %p144
      // Predicated region
      $region9: #{tpu_custom_call.1} parent=5 // pred_check
        _
      $region10: #{tpu_custom_call.1} parent=5 // pred_check_branch
        %147 = sbr.rel (%p144) target = $region12
      $region11: #{tpu_custom_call.1} parent=5 // pred_region
        %s148 = ssub.s32 %s16, 1
        // Predicated region
        $region13: #{tpu_custom_call.1} parent=11 // pred_check
          %p149 = pneg %p80
        $region14: #{tpu_custom_call.1} parent=11 // pred_check_branch
          %151 = sbr.rel (%p149) target = $region16
        $region15: #{tpu_custom_call.1} parent=11 // pred_region
          %s152 = smul.u32 32, %s26
          %s154 = ssub.s32 4096, 4096
          %155 = vsyncadd [#allocation6], %s154
          %s156 = smul.addr %s152, 128
          %s157 = scalar_lea.hbm %s1, %s156
          %s158 = sshll.u32 [#allocation5], 4
          %s159 = int_to_ptr.vmem [resolvable:$true] %s158
          %164 = dma.hbm_to_vmem [thread:$0]  %s157, 4096, %s159, [#allocation6], 128, 128, 8
        $region16: #{tpu_custom_call.1} parent=11 // pred_fallthru
          _
        // Predicated region
        $region17: #{tpu_custom_call.1} parent=11 // pred_check
          %p165 = pneg %p106
        $region18: #{tpu_custom_call.1} parent=11 // pred_check_branch
          %167 = sbr.rel (%p165) target = $region20
        $region19: #{tpu_custom_call.1} parent=11 // pred_region
          %s168 = smul.u32 2, %s26
          %p169 = scmp.lt.s32.totalorder %s168, 1
          %s170 = scalar_select %p169, %s168, 1
          %s171 = scalar_lea.vmem %s2, %s170
          %s172 = smul.u32 2, %s26
        $region20: #{tpu_custom_call.1} parent=11 // pred_fallthru
          _
      $region12: #{tpu_custom_call.1} parent=5 // pred_fallthru
        _
      %p173 = scmp.lt.s32.totalorder %s16, 2
      // Predicated region
      $region21: #{tpu_custom_call.1} parent=5 // pred_check
        %p174 = pneg %p173
      $region22: #{tpu_custom_call.1} parent=5 // pred_check_branch
        %176 = sbr.rel (%p174) target = $region24
      $region23: #{tpu_custom_call.1} parent=5 // pred_region
        // Predicated region
        $region25: #{tpu_custom_call.1} parent=23 // pred_check
          %p177 = pneg %p48
        $region26: #{tpu_custom_call.1} parent=23 // pred_check_branch
          %179 = sbr.rel (%p177) target = $region28
        $region27: #{tpu_custom_call.1} parent=23 // pred_region
          %s180 = sand.u32 %s38, 1
          %s181 = scalar_lea.sflag [#allocation3], %s180
          %s182 = sand.u32 %s38, 1
          %s183 = smul.addr %s182, 192
          %s184 = scalar_lea.vmem [#allocation2], %s183
          %s185 = smul.u32 24, %s23
          %s187 = ssub.s32 3072, 3072
          %188 = vsyncadd %s181, %s187
          %s189 = smul.addr %s185, 128
          %s190 = scalar_lea.hbm %s0, %s189
          %s191 = sshll.u32 %s184, 4
          %s192 = int_to_ptr.vmem [resolvable:$true] %s191
          %197 = dma.hbm_to_vmem [thread:$0]  %s190, 3072, %s192, %s181, 128, 128, 8
        $region28: #{tpu_custom_call.1} parent=23 // pred_fallthru
          _
      $region24: #{tpu_custom_call.1} parent=5 // pred_fallthru
        _
      %p198 = scmp.le.s32.totalorder 1, %s16
      %p199 = scmp.lt.s32.totalorder %s16, 3
      %p200 = pnand %p198, %p199
      %p201 = pneg %p200
      // Predicated region
      $region29: #{tpu_custom_call.1} parent=5 // pred_check
        _
      $region30: #{tpu_custom_call.1} parent=5 // pred_check_branch
        %203 = sbr.rel (%p200) target = $region32
      $region31: #{tpu_custom_call.1} parent=5 // pred_region
        %s204 = ssub.s32 %s16, 1
        %s205 = sand.u32 %s41, 1
        %s206 = scalar_lea.sflag [#allocation3], %s205
        %s207 = sand.u32 %s41, 1
        %s208 = smul.addr %s207, 192
        %s209 = scalar_lea.vmem [#allocation2], %s208
        // Predicated region
        $region33: #{tpu_custom_call.1} parent=31 // pred_check
          %p210 = pneg %p54
        $region34: #{tpu_custom_call.1} parent=31 // pred_check_branch
          %212 = sbr.rel (%p210) target = $region36
        $region35: #{tpu_custom_call.1} parent=31 // pred_region
          %213 = dma.done %s206, 3072
        $region36: #{tpu_custom_call.1} parent=31 // pred_fallthru
          _
        // Predicated region
        $region37: #{tpu_custom_call.1} parent=31 // pred_check
          %p214 = pneg %p80
        $region38: #{tpu_custom_call.1} parent=31 // pred_check_branch
          %216 = sbr.rel (%p214) target = $region40
        $region39: #{tpu_custom_call.1} parent=31 // pred_region
          %217 = dma.done [#allocation6], 4096
        $region40: #{tpu_custom_call.1} parent=31 // pred_fallthru
          _
        %s218 = sand.u32 %s41, 1
        %s219 = scalar_lea.sflag [#allocation3], %s218
        %s220 = sand.u32 %s41, 1
        %s221 = smul.addr %s220, 192
        %s222 = scalar_lea.vmem [#allocation2], %s221
        %p223 = pneg %p54
        %p224 = pneg %p51
        %p225 = pneg %p80
        %p226 = pneg %p77
        %s227 = smul.u32 2, %s26
        %p228 = scmp.lt.s32.totalorder %s227, 1
        %s229 = scalar_select %p228, %s227, 1
        %s230 = scalar_lea.vmem %s2, %s229
        %p231 = pneg %p106
        %p232 = pneg %p103
        %p233 = pneg %p134
        %p234 = pneg %p131
        %s235 = sand.u32 %s121, 1
        %s236 = scalar_lea.sflag [#allocation4], %s235
        %s237 = sand.u32 %s121, 1
        %s238 = smul.addr %s237, 384
        %s239 = scalar_lea.vmem [#allocation7], %s238
        %s240 = smul.u32 24, %s25
        %s241 = smul.u32 32, %s26
        %s242 = smul.u32 2, %s26
        %p243 = scmp.lt.s32.totalorder %s242, 1
        %s244 = scalar_select %p243, %s242, 1
        %s245 = scalar_lea.vmem %s2, %s244
        %s246 = smul.u32 2, %s26
        %s247 = smul.u32 24, %s25
        %s248 = smul.u32 2, %s26
        %v249 = vld [vmem:[%s209] sm:$0xff]
        %v250 = vld [vmem:[%s209 + $0x8] sm:$0xff]
        %v251 = vld [vmem:[%s209 + $0x10] sm:$0xff]
        %v252 = vld [vmem:[%s209 + $0x18] sm:$0xff]
        %v253 = vld [vmem:[%s209 + $0x20] sm:$0xff]
        %v254 = vld [vmem:[%s209 + $0x28] sm:$0xff]
        %v255 = vld [vmem:[%s209 + $0x30] sm:$0xff]
        %v256 = vld [vmem:[%s209 + $0x38] sm:$0xff]
        %v257 = vld [vmem:[%s209 + $0x40] sm:$0xff]
        %v258 = vld [vmem:[%s209 + $0x48] sm:$0xff]
        %v259 = vld [vmem:[%s209 + $0x50] sm:$0xff]
        %v260 = vld [vmem:[%s209 + $0x58] sm:$0xff]
        %v261 = vld [vmem:[%s209 + $0x60] sm:$0xff]
        %v262 = vld [vmem:[%s209 + $0x68] sm:$0xff]
        %v263 = vld [vmem:[%s209 + $0x70] sm:$0xff]
        %v264 = vld [vmem:[%s209 + $0x78] sm:$0xff]
        %v265 = vld [vmem:[%s209 + $0x80] sm:$0xff]
        %v266 = vld [vmem:[%s209 + $0x88] sm:$0xff]
        %v267 = vld [vmem:[%s209 + $0x90] sm:$0xff]
        %v268 = vld [vmem:[%s209 + $0x98] sm:$0xff]
        %v269 = vld [vmem:[%s209 + $0xa0] sm:$0xff]
        %v270 = vld [vmem:[%s209 + $0xa8] sm:$0xff]
        %v271 = vld [vmem:[%s209 + $0xb0] sm:$0xff]
        %v272 = vld [vmem:[%s209 + $0xb8] sm:$0xff]
        %v273 = vld [vmem:[#allocation5] sm:$0xff]
        %v274 = vld [vmem:[#allocation5 + $0x8] sm:$0xff]
        %v275 = vld [vmem:[#allocation5 + $0x10] sm:$0xff]
        %v276 = vld [vmem:[#allocation5 + $0x18] sm:$0xff]
        %v277 = vld [vmem:[#allocation5 + $0x20] sm:$0xff]
        %v278 = vld [vmem:[#allocation5 + $0x28] sm:$0xff]
        %v279 = vld [vmem:[#allocation5 + $0x30] sm:$0xff]
        %v280 = vld [vmem:[#allocation5 + $0x38] sm:$0xff]
        %v281 = vld [vmem:[#allocation5 + $0x40] sm:$0xff]
        %v282 = vld [vmem:[#allocation5 + $0x48] sm:$0xff]
        %v283 = vld [vmem:[#allocation5 + $0x50] sm:$0xff]
        %v284 = vld [vmem:[#allocation5 + $0x58] sm:$0xff]
        %v285 = vld [vmem:[#allocation5 + $0x60] sm:$0xff]
        %v286 = vld [vmem:[#allocation5 + $0x68] sm:$0xff]
        %v287 = vld [vmem:[#allocation5 + $0x70] sm:$0xff]
        %v288 = vld [vmem:[#allocation5 + $0x78] sm:$0xff]
        %v289 = vld [vmem:[#allocation5 + $0x80] sm:$0xff]
        %v290 = vld [vmem:[#allocation5 + $0x88] sm:$0xff]
        %v291 = vld [vmem:[#allocation5 + $0x90] sm:$0xff]
        %v292 = vld [vmem:[#allocation5 + $0x98] sm:$0xff]
        %v293 = vld [vmem:[#allocation5 + $0xa0] sm:$0xff]
        %v294 = vld [vmem:[#allocation5 + $0xa8] sm:$0xff]
        %v295 = vld [vmem:[#allocation5 + $0xb0] sm:$0xff]
        %v296 = vld [vmem:[#allocation5 + $0xb8] sm:$0xff]
        %v297 = vld [vmem:[#allocation5 + $0xc0] sm:$0xff]
        %v298 = vld [vmem:[#allocation5 + $0xc8] sm:$0xff]
        %v299 = vld [vmem:[#allocation5 + $0xd0] sm:$0xff]
        %v300 = vld [vmem:[#allocation5 + $0xd8] sm:$0xff]
        %v301 = vld [vmem:[#allocation5 + $0xe0] sm:$0xff]
        %v302 = vld [vmem:[#allocation5 + $0xe8] sm:$0xff]
        %v303 = vld [vmem:[#allocation5 + $0xf0] sm:$0xff]
        %v304 = vld [vmem:[#allocation5 + $0xf8] sm:$0xff]
        %v305 = vld [vmem:[%s245] sm:$0x3]
        %v307 = vlaneseq
        %v308 = vshrl.u32 %v307, 7
        %v309 = vsub.s32 0, %v308
        %v310 = vrot.slane %v305, %v309
        %v311 = vlaneseq
        %v312 = vshrl.u32 %v311, 7
        %v313 = vsub.s32 1, %v312
        %v314 = vrot.slane %v305, %v313
        %317 = vmatprep.subr.mxu0 0.0
        %318 = vmatpush1.xpose.msra.mxu0 %v273
        %319 = vmatprep.subr.mxu0 0.0
        %320 = vmatpush1.xpose.msra.mxu0 %v274
        %321 = vmatprep.subr.mxu0 0.0
        %322 = vmatpush1.xpose.msra.mxu0 %v275
        %323 = vmatprep.subr.mxu0 0.0
        %324 = vmatpush1.xpose.msra.mxu0 %v276
        %325 = vmatprep.subr.mxu0 0.0
        %326 = vmatpush1.xpose.msra.mxu0 %v277
        %327 = vmatprep.subr.mxu0 0.0
        %328 = vmatpush1.xpose.msra.mxu0 %v278
        %329 = vmatprep.subr.mxu0 0.0
        %330 = vmatpush1.xpose.msra.mxu0 %v279
        %331 = vmatprep.subr.mxu0 0.0
        %332 = vmatpush1.xpose.msra.mxu0 %v280
        %333 = vmatprep.subr.mxu0 0.0
        %334 = vmatpush1.xpose.msra.mxu0 %v281
        %335 = vmatprep.subr.mxu0 0.0
        %336 = vmatpush1.xpose.msra.mxu0 %v282
        %337 = vmatprep.subr.mxu0 0.0
        %338 = vmatpush1.xpose.msra.mxu0 %v283
        %339 = vmatprep.subr.mxu0 0.0
        %340 = vmatpush1.xpose.msra.mxu0 %v284
        %341 = vmatprep.subr.mxu0 0.0
        %342 = vmatpush1.xpose.msra.mxu0 %v285
        %343 = vmatprep.subr.mxu0 0.0
        %344 = vmatpush1.xpose.msra.mxu0 %v286
        %345 = vmatprep.subr.mxu0 0.0
        %346 = vmatpush1.xpose.msra.mxu0 %v287
        %347 = vmatprep.subr.mxu0 0.0
        %348 = vmatpush1.xpose.msra.mxu0 %v288
        %349 = vmatprep.subr.mxu0 0.0
        %350 = vmatpush1.xpose.msra.mxu0 %v289
        %351 = vmatprep.subr.mxu0 0.0
        %352 = vmatpush1.xpose.msra.mxu0 %v290
        %353 = vmatprep.subr.mxu0 0.0
        %354 = vmatpush1.xpose.msra.mxu0 %v291
        %355 = vmatprep.subr.mxu0 0.0
        %356 = vmatpush1.xpose.msra.mxu0 %v292
        %357 = vmatprep.subr.mxu0 0.0
        %358 = vmatpush1.xpose.msra.mxu0 %v293
        %359 = vmatprep.subr.mxu0 0.0
        %360 = vmatpush1.xpose.msra.mxu0 %v294
        %361 = vmatprep.subr.mxu0 0.0
        %362 = vmatpush1.xpose.msra.mxu0 %v295
        %363 = vmatprep.subr.mxu0 0.0
        %364 = vmatpush1.xpose.msra.mxu0 %v296
        %365 = vmatprep.subr.mxu0 0.0
        %366 = vmatpush1.xpose.msra.mxu0 %v297
        %367 = vmatprep.subr.mxu0 0.0
        %368 = vmatpush1.xpose.msra.mxu0 %v298
        %369 = vmatprep.subr.mxu0 0.0
        %370 = vmatpush1.xpose.msra.mxu0 %v299
        %371 = vmatprep.subr.mxu0 0.0
        %372 = vmatpush1.xpose.msra.mxu0 %v300
        %373 = vmatprep.subr.mxu0 0.0
        %374 = vmatpush1.xpose.msra.mxu0 %v301
        %375 = vmatprep.subr.mxu0 0.0
        %376 = vmatpush1.xpose.msra.mxu0 %v302
        %377 = vmatprep.subr.mxu0 0.0
        %378 = vmatpush1.xpose.msra.mxu0 %v303
        %379 = vmatprep.subr.mxu0 0.0
        %380 = vmatpush1.xpose.msra.mxu0 %v304
        %381 = vmatprep.mubr.f32.mxu0 0.0
        %382 = vmatmul.mubr.f32.gmra.mrb[0].mxu0 %v249
        %v383 = vpop.f32.mrb[0].mxu0
        %v384 = vadd.f32 %v310, %v383
        %v385 = vpop.f32.mrb[0].mxu0
        %v386 = vadd.f32 %v314, %v385
        %387 = vmatprep.mubr.f32.mxu0 0.0
        %388 = vmatmul.mubr.f32.gmra.mrb[0].mxu0 %v250
        %v389 = vpop.f32.mrb[0].mxu0
        %v390 = vadd.f32 %v310, %v389
        %v391 = vpop.f32.mrb[0].mxu0
        %v392 = vadd.f32 %v314, %v391
        %393 = vmatprep.mubr.f32.mxu0 0.0
        %394 = vmatmul.mubr.f32.gmra.mrb[0].mxu0 %v251
        %v395 = vpop.f32.mrb[0].mxu0
        %v396 = vadd.f32 %v310, %v395
        %v397 = vpop.f32.mrb[0].mxu0
        %v398 = vadd.f32 %v314, %v397
        %399 = vmatprep.mubr.f32.mxu0 0.0
        %400 = vmatmul.mubr.f32.gmra.mrb[0].mxu0 %v252
        %v401 = vpop.f32.mrb[0].mxu0
        %v402 = vadd.f32 %v310, %v401
        %v403 = vpop.f32.mrb[0].mxu0
        %v404 = vadd.f32 %v314, %v403
        %405 = vmatprep.mubr.f32.mxu0 0.0
        %406 = vmatmul.mubr.f32.gmra.mrb[0].mxu0 %v253
        %v407 = vpop.f32.mrb[0].mxu0
        %v408 = vadd.f32 %v310, %v407
        %v409 = vpop.f32.mrb[0].mxu0
        %v410 = vadd.f32 %v314, %v409
        %411 = vmatprep.mubr.f32.mxu0 0.0
        %412 = vmatmul.mubr.f32.gmra.mrb[0].mxu0 %v254
        %v413 = vpop.f32.mrb[0].mxu0
        %v414 = vadd.f32 %v310, %v413
        %v415 = vpop.f32.mrb[0].mxu0
        %v416 = vadd.f32 %v314, %v415
        %417 = vmatprep.mubr.f32.mxu0 0.0
        %418 = vmatmul.mubr.f32.gmra.mrb[0].mxu0 %v255
        %v419 = vpop.f32.mrb[0].mxu0
        %v420 = vadd.f32 %v310, %v419
        %v421 = vpop.f32.mrb[0].mxu0
        %v422 = vadd.f32 %v314, %v421
        %423 = vmatprep.mubr.f32.mxu0 0.0
        %424 = vmatmul.mubr.f32.gmra.mrb[0].mxu0 %v256
        %v425 = vpop.f32.mrb[0].mxu0
        %v426 = vadd.f32 %v310, %v425
        %v427 = vpop.f32.mrb[0].mxu0
        %v428 = vadd.f32 %v314, %v427
        %429 = vmatprep.mubr.f32.mxu0 0.0
        %430 = vmatmul.mubr.f32.gmra.mrb[0].mxu0 %v257
        %v431 = vpop.f32.mrb[0].mxu0
        %v432 = vadd.f32 %v310, %v431
        %v433 = vpop.f32.mrb[0].mxu0
        %v434 = vadd.f32 %v314, %v433
        %435 = vmatprep.mubr.f32.mxu0 0.0
        %436 = vmatmul.mubr.f32.gmra.mrb[0].mxu0 %v258
        %v437 = vpop.f32.mrb[0].mxu0
        %v438 = vadd.f32 %v310, %v437
        %v439 = vpop.f32.mrb[0].mxu0
        %v440 = vadd.f32 %v314, %v439
        %441 = vmatprep.mubr.f32.mxu0 0.0
        %442 = vmatmul.mubr.f32.gmra.mrb[0].mxu0 %v259
        %v443 = vpop.f32.mrb[0].mxu0
        %v444 = vadd.f32 %v310, %v443
        %v445 = vpop.f32.mrb[0].mxu0
        %v446 = vadd.f32 %v314, %v445
        %447 = vmatprep.mubr.f32.mxu0 0.0
        %448 = vmatmul.mubr.f32.gmra.mrb[0].mxu0 %v260
        %v449 = vpop.f32.mrb[0].mxu0
        %v450 = vadd.f32 %v310, %v449
        %v451 = vpop.f32.mrb[0].mxu0
        %v452 = vadd.f32 %v314, %v451
        %453 = vmatprep.mubr.f32.mxu0 0.0
        %454 = vmatmul.mubr.f32.gmra.mrb[0].mxu0 %v261
        %v455 = vpop.f32.mrb[0].mxu0
        %v456 = vadd.f32 %v310, %v455
        %v457 = vpop.f32.mrb[0].mxu0
        %v458 = vadd.f32 %v314, %v457
        %459 = vmatprep.mubr.f32.mxu0 0.0
        %460 = vmatmul.mubr.f32.gmra.mrb[0].mxu0 %v262
        %v461 = vpop.f32.mrb[0].mxu0
        %v462 = vadd.f32 %v310, %v461
        %v463 = vpop.f32.mrb[0].mxu0
        %v464 = vadd.f32 %v314, %v463
        %465 = vmatprep.mubr.f32.mxu0 0.0
        %466 = vmatmul.mubr.f32.gmra.mrb[0].mxu0 %v263
        %v467 = vpop.f32.mrb[0].mxu0
        %v468 = vadd.f32 %v310, %v467
        %v469 = vpop.f32.mrb[0].mxu0
        %v470 = vadd.f32 %v314, %v469
        %471 = vmatprep.mubr.f32.mxu0 0.0
        %472 = vmatmul.mubr.f32.gmra.mrb[0].mxu0 %v264
        %v473 = vpop.f32.mrb[0].mxu0
        %v474 = vadd.f32 %v310, %v473
        %v475 = vpop.f32.mrb[0].mxu0
        %v476 = vadd.f32 %v314, %v475
        %477 = vmatprep.mubr.f32.mxu0 0.0
        %478 = vmatmul.mubr.f32.gmra.mrb[0].mxu0 %v265
        %v479 = vpop.f32.mrb[0].mxu0
        %v480 = vadd.f32 %v310, %v479
        %v481 = vpop.f32.mrb[0].mxu0
        %v482 = vadd.f32 %v314, %v481
        %483 = vmatprep.mubr.f32.mxu0 0.0
        %484 = vmatmul.mubr.f32.gmra.mrb[0].mxu0 %v266
        %v485 = vpop.f32.mrb[0].mxu0
        %v486 = vadd.f32 %v310, %v485
        %v487 = vpop.f32.mrb[0].mxu0
        %v488 = vadd.f32 %v314, %v487
        %489 = vmatprep.mubr.f32.mxu0 0.0
        %490 = vmatmul.mubr.f32.gmra.mrb[0].mxu0 %v267
        %v491 = vpop.f32.mrb[0].mxu0
        %v492 = vadd.f32 %v310, %v491
        %v493 = vpop.f32.mrb[0].mxu0
        %v494 = vadd.f32 %v314, %v493
        %495 = vmatprep.mubr.f32.mxu0 0.0
        %496 = vmatmul.mubr.f32.gmra.mrb[0].mxu0 %v268
        %v497 = vpop.f32.mrb[0].mxu0
        %v498 = vadd.f32 %v310, %v497
        %v499 = vpop.f32.mrb[0].mxu0
        %v500 = vadd.f32 %v314, %v499
        %501 = vmatprep.mubr.f32.mxu0 0.0
        %502 = vmatmul.mubr.f32.gmra.mrb[0].mxu0 %v269
        %v503 = vpop.f32.mrb[0].mxu0
        %v504 = vadd.f32 %v310, %v503
        %v505 = vpop.f32.mrb[0].mxu0
        %v506 = vadd.f32 %v314, %v505
        %507 = vmatprep.mubr.f32.mxu0 0.0
        %508 = vmatmul.mubr.f32.gmra.mrb[0].mxu0 %v270
        %v509 = vpop.f32.mrb[0].mxu0
        %v510 = vadd.f32 %v310, %v509
        %v511 = vpop.f32.mrb[0].mxu0
        %v512 = vadd.f32 %v314, %v511
        %513 = vmatprep.mubr.f32.mxu0 0.0
        %514 = vmatmul.mubr.f32.gmra.mrb[0].mxu0 %v271
        %v515 = vpop.f32.mrb[0].mxu0
        %v516 = vadd.f32 %v310, %v515
        %v517 = vpop.f32.mrb[0].mxu0
        %v518 = vadd.f32 %v314, %v517
        %519 = vmatprep.mubr.f32.mxu0 0.0
        %520 = vmatmul.mubr.f32.gmra.mrb[0].mxu0 %v272
        %v521 = vpop.f32.mrb[0].mxu0
        %v522 = vadd.f32 %v310, %v521
        %v523 = vpop.f32.mrb[0].mxu0
        %v524 = vadd.f32 %v314, %v523
        %525 = vdwg.mxu0
        %526 = vst [vmem:[%s239] sm:$0xff] %v384
        %527 = vst [vmem:[%s239 + $0x8] sm:$0xff] %v386
        %528 = vst [vmem:[%s239 + $0x10] sm:$0xff] %v390
        %529 = vst [vmem:[%s239 + $0x18] sm:$0xff] %v392
        %530 = vst [vmem:[%s239 + $0x20] sm:$0xff] %v396
        %531 = vst [vmem:[%s239 + $0x28] sm:$0xff] %v398
        %532 = vst [vmem:[%s239 + $0x30] sm:$0xff] %v402
        %533 = vst [vmem:[%s239 + $0x38] sm:$0xff] %v404
        %534 = vst [vmem:[%s239 + $0x40] sm:$0xff] %v408
        %535 = vst [vmem:[%s239 + $0x48] sm:$0xff] %v410
        %536 = vst [vmem:[%s239 + $0x50] sm:$0xff] %v414
        %537 = vst [vmem:[%s239 + $0x58] sm:$0xff] %v416
        %538 = vst [vmem:[%s239 + $0x60] sm:$0xff] %v420
        %539 = vst [vmem:[%s239 + $0x68] sm:$0xff] %v422
        %540 = vst [vmem:[%s239 + $0x70] sm:$0xff] %v426
        %541 = vst [vmem:[%s239 + $0x78] sm:$0xff] %v428
        %542 = vst [vmem:[%s239 + $0x80] sm:$0xff] %v432
        %543 = vst [vmem:[%s239 + $0x88] sm:$0xff] %v434
        %544 = vst [vmem:[%s239 + $0x90] sm:$0xff] %v438
        %545 = vst [vmem:[%s239 + $0x98] sm:$0xff] %v440
        %546 = vst [vmem:[%s239 + $0xa0] sm:$0xff] %v444
        %547 = vst [vmem:[%s239 + $0xa8] sm:$0xff] %v446
        %548 = vst [vmem:[%s239 + $0xb0] sm:$0xff] %v450
        %549 = vst [vmem:[%s239 + $0xb8] sm:$0xff] %v452
        %550 = vst [vmem:[%s239 + $0xc0] sm:$0xff] %v456
        %551 = vst [vmem:[%s239 + $0xc8] sm:$0xff] %v458
        %552 = vst [vmem:[%s239 + $0xd0] sm:$0xff] %v462
        %553 = vst [vmem:[%s239 + $0xd8] sm:$0xff] %v464
        %554 = vst [vmem:[%s239 + $0xe0] sm:$0xff] %v468
        %555 = vst [vmem:[%s239 + $0xe8] sm:$0xff] %v470
        %556 = vst [vmem:[%s239 + $0xf0] sm:$0xff] %v474
        %557 = vst [vmem:[%s239 + $0xf8] sm:$0xff] %v476
        %558 = vst [vmem:[%s239 + $0x100] sm:$0xff] %v480
        %559 = vst [vmem:[%s239 + $0x108] sm:$0xff] %v482
        %560 = vst [vmem:[%s239 + $0x110] sm:$0xff] %v486
        %561 = vst [vmem:[%s239 + $0x118] sm:$0xff] %v488
        %562 = vst [vmem:[%s239 + $0x120] sm:$0xff] %v492
        %563 = vst [vmem:[%s239 + $0x128] sm:$0xff] %v494
        %564 = vst [vmem:[%s239 + $0x130] sm:$0xff] %v498
        %565 = vst [vmem:[%s239 + $0x138] sm:$0xff] %v500
        %566 = vst [vmem:[%s239 + $0x140] sm:$0xff] %v504
        %567 = vst [vmem:[%s239 + $0x148] sm:$0xff] %v506
        %568 = vst [vmem:[%s239 + $0x150] sm:$0xff] %v510
        %569 = vst [vmem:[%s239 + $0x158] sm:$0xff] %v512
        %570 = vst [vmem:[%s239 + $0x160] sm:$0xff] %v516
        %571 = vst [vmem:[%s239 + $0x168] sm:$0xff] %v518
        %572 = vst [vmem:[%s239 + $0x170] sm:$0xff] %v522
        %573 = vst [vmem:[%s239 + $0x178] sm:$0xff] %v524
        %s574 = sand.u32 %s121, 1
        %s575 = scalar_lea.sflag [#allocation4], %s574
        %s576 = sand.u32 %s121, 1
        %s577 = smul.addr %s576, 384
        %s578 = scalar_lea.vmem [#allocation7], %s577
        // Predicated region
        $region41: #{tpu_custom_call.1} parent=31 // pred_check
          %p579 = pneg %p131
        $region42: #{tpu_custom_call.1} parent=31 // pred_check_branch
          %581 = sbr.rel (%p579) target = $region44
        $region43: #{tpu_custom_call.1} parent=31 // pred_region
          %s582 = smul.u32 24, %s25
          %s583 = smul.u32 2, %s26
          %s585 = ssub.s32 6144, 6144
          %586 = vsyncadd %s575, %s585
          %s587 = smul.addr %s582, 2
          %s588 = sadd.s32 %s583, %s587
          %s589 = smul.addr %s588, 128
          %s590 = scalar_lea.hbm %s3, %s589
          %s591 = sshll.u32 %s578, 4
          %s592 = int_to_ptr.vmem [resolvable:$true] %s591
          %597 = dma.vmem_to_hbm [thread:$0]  %s592, 6144, %s590, %s575, 256, 256, 16
        $region44: #{tpu_custom_call.1} parent=31 // pred_fallthru
          _
      $region32: #{tpu_custom_call.1} parent=5 // pred_fallthru
        _
      %p598 = scmp.le.s32.totalorder 2, %s16
      // Predicated region
      $region45: #{tpu_custom_call.1} parent=5 // pred_check
        %p599 = pneg %p598
      $region46: #{tpu_custom_call.1} parent=5 // pred_check_branch
        %601 = sbr.rel (%p599) target = $region48
      $region47: #{tpu_custom_call.1} parent=5 // pred_region
        %s602 = ssub.s32 %s16, 2
        // Predicated region
        $region49: #{tpu_custom_call.1} parent=47 // pred_check
          %p603 = pneg %p137
        $region50: #{tpu_custom_call.1} parent=47 // pred_check_branch
          %605 = sbr.rel (%p603) target = $region52
        $region51: #{tpu_custom_call.1} parent=47 // pred_region
          %s606 = sand.u32 %s122, 1
          %s607 = scalar_lea.sflag [#allocation4], %s606
          %s608 = sand.u32 %s122, 1
          %s609 = smul.addr %s608, 384
          %s610 = scalar_lea.vmem [#allocation7], %s609
          %611 = dma.done %s607, 6144
        $region52: #{tpu_custom_call.1} parent=47 // pred_fallthru
          _
      $region48: #{tpu_custom_call.1} parent=5 // pred_fallthru
        _
    $region6: #{tpu_custom_call.1} parent=1 // loop_footer
      %s20 = sadd.s32 1, %s16
    $region7: #{tpu_custom_call.1} parent=1 // loop_footer_branch
      %15 = sbr.rel target = $region3
    $region8: #{tpu_custom_call.1} parent=1 // loop_exit
      _
    %612 = vsyncpa [#allocation3], 1
    %s613 = scalar_lea.sflag [#allocation3], 1
    %614 = vsyncpa %s613, 1
    %615 = vsyncpa [#allocation6], 1
    %616 = vsyncpa [#allocation4], 1
    %s617 = scalar_lea.sflag [#allocation4], 1
    %618 = vsyncpa %s617, 1

</llo_original>
